<compile_context>
chip_gen: v7x
topology: tpu7x:2x2x1
jax: 0.10.0
libtpu: 0.0.40
codegen_flags: <defaults>
</compile_context>

<pallas_src>
import functools

import jax
import jax.numpy as jnp
from jax.experimental import pallas as pl
from jax.experimental.pallas import tpu as pltpu


def _round_up(x, m):
    return ((x + m - 1) // m) * m


def _block_kernel(x_ref, w1_ref, c1_ref, w2_ref, c2_ref, o_ref, *, mm_dtype):
    """Fused: relu(x @ W1' + c1) @ W2' + c2 -> relu -> +x.  BN/bias pre-folded."""
    x = x_ref[...]                                            # (TN, L) f32

    h = jnp.dot(x.astype(mm_dtype), w1_ref[...],
                preferred_element_type=jnp.float32)
    h = jnp.maximum(h + c1_ref[...], 0.0)                     # folded bias/BN affine, relu
    # dropout: identity (eval mode)

    h = jnp.dot(h.astype(mm_dtype), w2_ref[...],
                preferred_element_type=jnp.float32)
    h = jnp.maximum(h + c2_ref[...], 0.0)
    # dropout: identity (eval mode)

    o_ref[...] = x + h                                        # residual add, single store


def fold_params(params, *, eps=1e-5, mm_dtype=jnp.float32):
    """One-time offline fold of bias + BatchNorm affine into the weights.

    nn.Linear weight convention is [out, in]; transpose to [in, out] so the
    kernel does a plain x @ W, and scale columns by the BN scale.
    """
    l = params["w1"].shape[0]
    s1 = params["gamma1"] / jnp.sqrt(params["var1"] + eps)
    s2 = params["gamma2"] / jnp.sqrt(params["var2"] + eps)
    w1f = (params["w1"].T * s1[None, :]).astype(mm_dtype)           # [L_in, L_out]
    w2f = (params["w2"].T * s2[None, :]).astype(mm_dtype)
    c1 = ((params["b1"] - params["mean1"]) * s1 + params["beta1"]).reshape(1, l).astype(jnp.float32)
    c2 = ((params["b2"] - params["mean2"]) * s2 + params["beta2"]).reshape(1, l).astype(jnp.float32)
    return {"w1f": w1f, "c1": c1, "w2f": w2f, "c2": c2, "mm_dtype": mm_dtype}


def my_linear_simple_pallas(x, folded, *, tile_n=1024):
    """x: [N, L] float32.  folded: output of fold_params()."""
    n, l = x.shape
    mm_dtype = folded["mm_dtype"]

    # Batch tile: multiple of 16 (clean bf16 sublane packing), no larger than the
    # 16-rounded batch, capped at 4096 rows so double-buffered x/out tiles stay
    # comfortably inside the default scoped VMEM on v5e/v6e/v7x.  When the batch
    # is big enough, split it so the grid has >=2 steps and the parallel axis can
    # shard rows across v7x's two TensorCores.
    tile_n = max(16, min(tile_n, 4096, _round_up(n, 16)))
    if n > 16:
        tile_n = min(tile_n, max(16, _round_up(pl.cdiv(n, 2), 16)))

    # Ragged last block: Pallas masks the out-of-range stores, so no host-side
    # padding or output slicing is needed (no extra HBM round trip).
    grid = (pl.cdiv(n, tile_n),)

    x_spec = pl.BlockSpec((tile_n, l), lambda i: (i, 0))
    o_spec = pl.BlockSpec((tile_n, l), lambda i: (i, 0))
    w_spec = pl.BlockSpec((l, l), lambda i: (0, 0))     # weights resident across the grid
    c_spec = pl.BlockSpec((1, l), lambda i: (0, 0))     # folded bias/BN row, resident

    itemsize = jnp.dtype(mm_dtype).itemsize
    cost = pl.CostEstimate(
        flops=4 * n * l * l,                             # two N x L x L GEMMs
        transcendentals=0,
        bytes_accessed=2 * n * l * 4 + 2 * l * l * itemsize + 2 * l * 4,
    )

    kernel = functools.partial(_block_kernel, mm_dtype=mm_dtype)

    return pl.pallas_call(
        kernel,
        out_shape=jax.ShapeDtypeStruct((n, l), x.dtype),
        grid_spec=pltpu.PrefetchScalarGridSpec(
            num_scalar_prefetch=0,
            grid=grid,
            in_specs=[x_spec, w_spec, c_spec, w_spec, c_spec],
            out_specs=o_spec,
        ),
        compiler_params=pltpu.CompilerParams(
            dimension_semantics=("parallel",)),
        cost_estimate=cost,
    )(x, folded["w1f"], folded["c1"], folded["w2f"], folded["c2"])


def reference_jax(x, params):
    """Pure-JAX reference matching PyTorch eval-mode forward."""
    eps = 1e-5

    def bn(z, g, b, m, v):
        return (z - m) / jnp.sqrt(v + eps) * g + b

    y = x @ params["w1"].T + params["b1"]
    y = bn(y, params["gamma1"], params["beta1"], params["mean1"], params["var1"])
    y = jnp.maximum(y, 0.0)
    y = y @ params["w2"].T + params["b2"]
    y = bn(y, params["gamma2"], params["beta2"], params["mean2"], params["var2"])
    y = jnp.maximum(y, 0.0)
    return x + y


def make_params(key, l_size):
    ks = jax.random.split(key, 8)
    scale = 1.0 / jnp.sqrt(l_size)
    return {
        # nn.Linear convention: weight [out, in]
        "w1": jax.random.uniform(ks[0], (l_size, l_size), jnp.float32, -scale, scale),
        "b1": jax.random.uniform(ks[1], (l_size,), jnp.float32, -scale, scale),
        "w2": jax.random.uniform(ks[2], (l_size, l_size), jnp.float32, -scale, scale),
        "b2": jax.random.uniform(ks[3], (l_size,), jnp.float32, -scale, scale),
        # BatchNorm1d parameters / running stats (synthetic but non-trivial)
        "gamma1": 1.0 + 0.1 * jax.random.normal(ks[4], (l_size,), jnp.float32),
        "beta1": 0.1 * jax.random.normal(ks[5], (l_size,), jnp.float32),
        "mean1": 0.05 * jax.random.normal(ks[6], (l_size,), jnp.float32),
        "var1": 1.0 + 0.1 * jnp.abs(jax.random.normal(ks[7], (l_size,), jnp.float32)),
        "gamma2": 1.0 + 0.05 * jnp.cos(jnp.arange(l_size, dtype=jnp.float32)),
        "beta2": 0.05 * jnp.sin(jnp.arange(l_size, dtype=jnp.float32)),
        "mean2": 0.02 * jnp.cos(jnp.arange(l_size, dtype=jnp.float32) * 0.3),
        "var2": 1.0 + 0.05 * jnp.abs(jnp.sin(jnp.arange(l_size, dtype=jnp.float32) * 0.7)),
    }


if __name__ == "__main__":
    L_SIZE = 128    # linear_size (lane-dense last dim)
    BATCH = 48      # non-multiple of the tile -> exercises the ragged-block masking path

    key = jax.random.PRNGKey(0)
    kx, kp = jax.random.split(key)
    x = jax.random.normal(kx, (BATCH, L_SIZE), dtype=jnp.float32)
    params = make_params(kp, L_SIZE)

    ref = reference_jax(x, params)

    # --- f32 operands: tight check against the PyTorch-eval-equivalent reference ---
    folded_f32 = fold_params(params, mm_dtype=jnp.float32)
    out_f32 = jax.block_until_ready(my_linear_simple_pallas(x, folded_f32))
    assert out_f32.shape == ref.shape
    assert jnp.allclose(out_f32, ref, atol=1e-4, rtol=1e-4), (
        f"f32 max abs err = {jnp.max(jnp.abs(out_f32 - ref))}")

    # --- bf16 operands (recommended on v6e/v7x), f32 accumulate: relaxed tolerance ---
    folded_bf16 = fold_params(params, mm_dtype=jnp.bfloat16)
    out_bf16 = jax.block_until_ready(my_linear_simple_pallas(x, folded_bf16))
    assert out_bf16.shape == ref.shape
    assert jnp.allclose(out_bf16, ref, atol=1e-1, rtol=1e-1), (
        f"bf16 max abs err = {jnp.max(jnp.abs(out_bf16 - ref))}")

    print("KERNEL_OK")
</pallas_src>

<mosaic_0001>
module attributes {stable_mosaic.version = 11 : i64} {
  func.func @_block_kernel(%arg0: i32, %arg1: memref<32x128xf32, #tpu.memory_space<vmem>>, %arg2: memref<128x128xf32, #tpu.memory_space<vmem>>, %arg3: memref<1x128xf32, #tpu.memory_space<vmem>>, %arg4: memref<128x128xf32, #tpu.memory_space<vmem>>, %arg5: memref<1x128xf32, #tpu.memory_space<vmem>>, %arg6: memref<32x128xf32, #tpu.memory_space<vmem>>) attributes {dimension_semantics = [#tpu.dimension_semantics<parallel>], iteration_bounds = array<i64: 2>, scalar_prefetch = 0 : i64, scratch_operands = 0 : i64, tpu.core_type = #tpu.core_type<tc>, window_params = [{transform_indices = @transform_0, window_bounds = array<i64: 32, 128>}, {pipeline_mode = #tpu.pipeline_mode<synchronous>, transform_indices = @transform_1, window_bounds = array<i64: 128, 128>}, {pipeline_mode = #tpu.pipeline_mode<synchronous>, transform_indices = @transform_2, window_bounds = array<i64: 1, 128>}, {pipeline_mode = #tpu.pipeline_mode<synchronous>, transform_indices = @transform_3, window_bounds = array<i64: 128, 128>}, {pipeline_mode = #tpu.pipeline_mode<synchronous>, transform_indices = @transform_4, window_bounds = array<i64: 1, 128>}, {transform_indices = @transform_5, window_bounds = array<i64: 32, 128>}]} {
    %c0 = arith.constant 0 : index
    %c0_0 = arith.constant 0 : index
    %0 = vector.load %arg1[%c0, %c0_0] : memref<32x128xf32, #tpu.memory_space<vmem>>, vector<32x128xf32>
    %c0_1 = arith.constant 0 : index
    %c0_2 = arith.constant 0 : index
    %1 = vector.load %arg2[%c0_1, %c0_2] : memref<128x128xf32, #tpu.memory_space<vmem>>, vector<128x128xf32>
    %cst = arith.constant dense<0.000000e+00> : vector<32x128xf32>
    %2 = tpu.matmul %0, %1, %cst {dimension_numbers = #tpu.dot_dimension_numbers<[1], [0], [0], [1], [0, 0, 1, 1], [], []>} : vector<32x128xf32>, vector<128x128xf32>, vector<32x128xf32> -> vector<32x128xf32>
    %c0_3 = arith.constant 0 : index
    %c0_4 = arith.constant 0 : index
    %3 = vector.load %arg3[%c0_3, %c0_4] : memref<1x128xf32, #tpu.memory_space<vmem>>, vector<1x128xf32>
    %4 = vector.broadcast %3 : vector<1x128xf32> to vector<32x128xf32>
    %5 = arith.addf %2, %4 : vector<32x128xf32>
    %cst_5 = arith.constant 0.000000e+00 : f32
    %6 = vector.broadcast %cst_5 : f32 to vector<32x128xf32>
    %7 = arith.maximumf %5, %6 : vector<32x128xf32>
    %c0_6 = arith.constant 0 : index
    %c0_7 = arith.constant 0 : index
    %8 = vector.load %arg4[%c0_6, %c0_7] : memref<128x128xf32, #tpu.memory_space<vmem>>, vector<128x128xf32>
    %cst_8 = arith.constant dense<0.000000e+00> : vector<32x128xf32>
    %9 = tpu.matmul %7, %8, %cst_8 {dimension_numbers = #tpu.dot_dimension_numbers<[1], [0], [0], [1], [0, 0, 1, 1], [], []>} : vector<32x128xf32>, vector<128x128xf32>, vector<32x128xf32> -> vector<32x128xf32>
    %c0_9 = arith.constant 0 : index
    %c0_10 = arith.constant 0 : index
    %10 = vector.load %arg5[%c0_9, %c0_10] : memref<1x128xf32, #tpu.memory_space<vmem>>, vector<1x128xf32>
    %11 = vector.broadcast %10 : vector<1x128xf32> to vector<32x128xf32>
    %12 = arith.addf %9, %11 : vector<32x128xf32>
    %cst_11 = arith.constant 0.000000e+00 : f32
    %13 = vector.broadcast %cst_11 : f32 to vector<32x128xf32>
    %14 = arith.maximumf %12, %13 : vector<32x128xf32>
    %15 = arith.addf %0, %14 : vector<32x128xf32>
    %c0_12 = arith.constant 0 : index
    %c0_13 = arith.constant 0 : index
    %16 = vector.load %arg6[%c0_12, %c0_13] : memref<32x128xf32, #tpu.memory_space<vmem>>, vector<32x128xf32>
    tpu.vector_store %arg6[%c0_12, %c0_13], %15 {strides = array<i32>} : memref<32x128xf32, #tpu.memory_space<vmem>>, vector<32x128xf32>,
    return
  }
  func.func @transform_0(%arg0: i32) -> (i32, i32) {
    %c0_i32 = arith.constant 0 : i32
    %c0_i32_0 = arith.constant 0 : i32
    return %arg0, %c0_i32 : i32, i32
  }
  func.func @transform_1(%arg0: i32) -> (i32, i32) {
    %c0_i32 = arith.constant 0 : i32
    %c0_i32_0 = arith.constant 0 : i32
    %c0_i32_1 = arith.constant 0 : i32
    return %c0_i32, %c0_i32_0 : i32, i32
  }
  func.func @transform_2(%arg0: i32) -> (i32, i32) {
    %c0_i32 = arith.constant 0 : i32
    %c0_i32_0 = arith.constant 0 : i32
    %c0_i32_1 = arith.constant 0 : i32
    return %c0_i32, %c0_i32_0 : i32, i32
  }
  func.func @transform_3(%arg0: i32) -> (i32, i32) {
    %c0_i32 = arith.constant 0 : i32
    %c0_i32_0 = arith.constant 0 : i32
    %c0_i32_1 = arith.constant 0 : i32
    return %c0_i32, %c0_i32_0 : i32, i32
  }
  func.func @transform_4(%arg0: i32) -> (i32, i32) {
    %c0_i32 = arith.constant 0 : i32
    %c0_i32_0 = arith.constant 0 : i32
    %c0_i32_1 = arith.constant 0 : i32
    return %c0_i32, %c0_i32_0 : i32, i32
  }
  func.func @transform_5(%arg0: i32) -> (i32, i32) {
    %c0_i32 = arith.constant 0 : i32
    %c0_i32_0 = arith.constant 0 : i32
    return %arg0, %c0_i32 : i32, i32
  }
}

</mosaic_0001>

<llo_original>
// kernel: tpu_custom_call.1
$region0: #{tpu_custom_call.1}
  #allocation0 [shape = 'u32[]', space=smem, size = 0x4, offset = 0x4, fixed_abs, tag = 'smem constant byte address 0x4 - core index']
  #allocation1 [shape = 'u32[144,128]{1,0:T(1,128)}', space=vmem, size = 0x12000, scoped, tag = 'internal scratch']
  %s0 = inlined_call_operand.hbm [shape: f32[48,128], index: 0, kind: input, shape index: {}]
  %s1 = inlined_call_operand.hbm [shape: f32[128,128], index: 1, kind: input, shape index: {}]
  %s2 = inlined_call_operand.vmem [shape: f32[1,128], index: 2, kind: input, shape index: {}]
  %s3 = inlined_call_operand.hbm [shape: f32[128,128], index: 3, kind: input, shape index: {}]
  %s4 = inlined_call_operand.vmem [shape: f32[1,128], index: 4, kind: input, shape index: {}]
  %s5 = inlined_call_operand.hbm [shape: f32[48,128], index: 5, kind: output, shape index: {}]
  %s6 = sld [smem:[#allocation0]]
  $region65: #{tpu_custom_call.1} parent=0
    _
  %s8 = ssub.s32 1, %s6
  %s9 = scalar_select 0, %s8, %s6
  $region1: #{tpu_custom_call.1} parent=0
    #allocation2 [shape = 'u8[32768]{0}', space=vmem, size = 0x8000, scoped, tag = 'input window, operand 0']
    #allocation3 [shape = 's32[2]{0}', space=sflag, size = 0x8, scoped, tag = 'scoped memory for tpu_custom_call.1']
    #allocation4 [shape = 's32[2]{0}', space=sflag, size = 0x8, scoped, tag = 'scoped memory for tpu_custom_call.1']
    #allocation5 [shape = 'u8[65536]{0}', space=vmem, size = 0x10000, scoped, tag = 'input window, operand 1, single buffered']
    #allocation6 [shape = 's32[1]{0}', space=sflag, size = 0x4, scoped, tag = 'scoped memory for tpu_custom_call.1']
    #allocation7 [shape = 'u8[65536]{0}', space=vmem, size = 0x10000, scoped, tag = 'input window, operand 3, single buffered']
    #allocation8 [shape = 'u8[32768]{0}', space=vmem, size = 0x8000, scoped, tag = 'output window, operand 0']
    %10 = vsyncpa [#allocation3], 0
    %s11 = scalar_lea.sflag [#allocation3], 1
    %12 = vsyncpa %s11, 0
    %13 = vsyncpa [#allocation6], 0
    %14 = vsyncpa [#allocation4], 0
    %s15 = scalar_lea.sflag [#allocation4], 1
    %16 = vsyncpa %s15, 0
    loop: start=0, step=1, limit=4
    $region2: #{tpu_custom_call.1} parent=1 // loop_pre_header
      _
    $region3: #{tpu_custom_call.1} parent=1 // loop_header
      %s18 = sphi 0, %s22
      %p19 = scmp.ge.s32.totalorder %s18, 4
      %s28 = sphi 0, %s30
      %s31 = sphi 0, %s28
      %s32 = sphi 0, %s31
      %s48 = sphi 0, %s32
      %s52 = sphi 0, %s52
      %s54 = sphi 0, %s52
      %s55 = sphi 0, %s54
      %s69 = sphi 0, %s55
      %s73 = sphi 0, %s73
      %s75 = sphi 0, %s73
      %s76 = sphi 0, %s75
      %s90 = sphi 0, %s76
      %s94 = sphi 0, %s94
      %s96 = sphi 0, %s94
      %s97 = sphi 0, %s96
      %s111 = sphi 0, %s97
      %s115 = sphi 0, %s115
      %s117 = sphi 0, %s115
      %s118 = sphi 0, %s117
      %s132 = sphi 0, %s118
      %s138 = sphi 0, %s140
      %s141 = sphi 0, %s138
      %s142 = sphi 0, %s141
      %s158 = sphi 0, %s142
    $region4: #{tpu_custom_call.1} parent=1 // loop_header_branch
      %21 = sbr.rel (%p19) target = $region8
    $region5: #{tpu_custom_call.1} parent=1 // loop_body
      %s23 = ssub.s32 %s18, 1
      %s24 = ssub.s32 %s18, 2
      %s25 = sadd.s32 %s18, 1
      %s26 = ssub.s32 %s18, %s25
      %p27 = scmp.eq.s32.totalorder %s26, 0
      %s29 = sadd.s32 %s28, 1
      %s30 = scalar_select %p27, %s28, %s29
      %p33 = pneg %p27
      %p34 = scmp.eq.s32.totalorder %s18, 1
      %p35 = por %p33, %p34
      %p36 = scmp.ne.s32.totalorder %s28, %s31
      %p37 = scmp.eq.s32.totalorder %s18, 0
      %p38 = por %p36, %p37
      %p39 = scmp.ne.s32.totalorder %s28, %s31
      %p40 = scmp.eq.s32.totalorder %s23, 1
      %p41 = por %p39, %p40
      %p42 = scmp.ne.s32.totalorder %s31, %s32
      %p43 = scmp.eq.s32.totalorder %s23, 0
      %p44 = por %p42, %p43
      %p45 = scmp.ne.s32.totalorder %s31, %s32
      %p46 = scmp.eq.s32.totalorder %s24, 1
      %p47 = por %p45, %p46
      %p49 = scmp.ne.s32.totalorder %s32, %s48
      %p50 = scmp.eq.s32.totalorder %s24, 0
      %p51 = por %p49, %p50
      %s53 = sadd.s32 %s52, 1
      %p56 = scmp.eq.s32.totalorder %s18, 1
      %p57 = scmp.ne.s32.totalorder %s52, %s54
      %p58 = scmp.eq.s32.totalorder %s18, 0
      %p59 = por %p57, %p58
      %p60 = scmp.ne.s32.totalorder %s52, %s54
      %p61 = scmp.eq.s32.totalorder %s23, 1
      %p62 = por %p60, %p61
      %p63 = scmp.ne.s32.totalorder %s54, %s55
      %p64 = scmp.eq.s32.totalorder %s23, 0
      %p65 = por %p63, %p64
      %p66 = scmp.ne.s32.totalorder %s54, %s55
      %p67 = scmp.eq.s32.totalorder %s24, 1
      %p68 = por %p66, %p67
      %p70 = scmp.ne.s32.totalorder %s55, %s69
      %p71 = scmp.eq.s32.totalorder %s24, 0
      %p72 = por %p70, %p71
      %s74 = sadd.s32 %s73, 1
      %p77 = scmp.eq.s32.totalorder %s18, 1
      %p78 = scmp.ne.s32.totalorder %s73, %s75
      %p79 = scmp.eq.s32.totalorder %s18, 0
      %p80 = por %p78, %p79
      %p81 = scmp.ne.s32.totalorder %s73, %s75
      %p82 = scmp.eq.s32.totalorder %s23, 1
      %p83 = por %p81, %p82
      %p84 = scmp.ne.s32.totalorder %s75, %s76
      %p85 = scmp.eq.s32.totalorder %s23, 0
      %p86 = por %p84, %p85
      %p87 = scmp.ne.s32.totalorder %s75, %s76
      %p88 = scmp.eq.s32.totalorder %s24, 1
      %p89 = por %p87, %p88
      %p91 = scmp.ne.s32.totalorder %s76, %s90
      %p92 = scmp.eq.s32.totalorder %s24, 0
      %p93 = por %p91, %p92
      %s95 = sadd.s32 %s94, 1
      %p98 = scmp.eq.s32.totalorder %s18, 1
      %p99 = scmp.ne.s32.totalorder %s94, %s96
      %p100 = scmp.eq.s32.totalorder %s18, 0
      %p101 = por %p99, %p100
      %p102 = scmp.ne.s32.totalorder %s94, %s96
      %p103 = scmp.eq.s32.totalorder %s23, 1
      %p104 = por %p102, %p103
      %p105 = scmp.ne.s32.totalorder %s96, %s97
      %p106 = scmp.eq.s32.totalorder %s23, 0
      %p107 = por %p105, %p106
      %p108 = scmp.ne.s32.totalorder %s96, %s97
      %p109 = scmp.eq.s32.totalorder %s24, 1
      %p110 = por %p108, %p109
      %p112 = scmp.ne.s32.totalorder %s97, %s111
      %p113 = scmp.eq.s32.totalorder %s24, 0
      %p114 = por %p112, %p113
      %s116 = sadd.s32 %s115, 1
      %p119 = scmp.eq.s32.totalorder %s18, 1
      %p120 = scmp.ne.s32.totalorder %s115, %s117
      %p121 = scmp.eq.s32.totalorder %s18, 0
      %p122 = por %p120, %p121
      %p123 = scmp.ne.s32.totalorder %s115, %s117
      %p124 = scmp.eq.s32.totalorder %s23, 1
      %p125 = por %p123, %p124
      %p126 = scmp.ne.s32.totalorder %s117, %s118
      %p127 = scmp.eq.s32.totalorder %s23, 0
      %p128 = por %p126, %p127
      %p129 = scmp.ne.s32.totalorder %s117, %s118
      %p130 = scmp.eq.s32.totalorder %s24, 1
      %p131 = por %p129, %p130
      %p133 = scmp.ne.s32.totalorder %s118, %s132
      %p134 = scmp.eq.s32.totalorder %s24, 0
      %p135 = por %p133, %p134
      %s136 = ssub.s32 %s18, %s25
      %p137 = scmp.eq.s32.totalorder %s136, 0
      %s139 = sadd.s32 %s138, 1
      %s140 = scalar_select %p137, %s138, %s139
      %p143 = pneg %p137
      %p144 = scmp.eq.s32.totalorder %s18, 1
      %p145 = por %p143, %p144
      %p146 = scmp.ne.s32.totalorder %s138, %s141
      %p147 = scmp.eq.s32.totalorder %s18, 0
      %p148 = por %p146, %p147
      %p149 = scmp.ne.s32.totalorder %s138, %s141
      %p150 = scmp.eq.s32.totalorder %s23, 1
      %p151 = por %p149, %p150
      %p152 = scmp.ne.s32.totalorder %s141, %s142
      %p153 = scmp.eq.s32.totalorder %s23, 0
      %p154 = por %p152, %p153
      %p155 = scmp.ne.s32.totalorder %s141, %s142
      %p156 = scmp.eq.s32.totalorder %s24, 1
      %p157 = por %p155, %p156
      %p159 = scmp.ne.s32.totalorder %s142, %s158
      %p160 = scmp.eq.s32.totalorder %s24, 0
      %p161 = por %p159, %p160
      %p162 = scmp.le.s32.totalorder 1, %s18
      %p163 = scmp.lt.s32.totalorder %s18, 3
      %p164 = pnand %p162, %p163
      %p165 = pneg %p164
      // Predicated region
      $region9: #{tpu_custom_call.1} parent=5 // pred_check
        _
      $region10: #{tpu_custom_call.1} parent=5 // pred_check_branch
        %167 = sbr.rel (%p164) target = $region12
      $region11: #{tpu_custom_call.1} parent=5 // pred_region
        %s168 = ssub.s32 %s18, 1
        // Predicated region
        $region13: #{tpu_custom_call.1} parent=11 // pred_check
          %p169 = pneg %p65
        $region14: #{tpu_custom_call.1} parent=11 // pred_check_branch
          %171 = sbr.rel (%p169) target = $region16
        $region15: #{tpu_custom_call.1} parent=11 // pred_region
          %s173 = ssub.s32 2048, 2048
          %174 = vsyncadd [#allocation6], %s173
          %s175 = sshll.u32 [#allocation5], 4
          %s176 = int_to_ptr.vmem [resolvable:$true] %s175
          %181 = dma.hbm_to_vmem [thread:$0]  %s1, 2048, %s176, [#allocation6], 128, 128, 8
        $region16: #{tpu_custom_call.1} parent=11 // pred_fallthru
          _
        // Predicated region
        $region17: #{tpu_custom_call.1} parent=11 // pred_check
          %p182 = pneg %p86
        $region18: #{tpu_custom_call.1} parent=11 // pred_check_branch
          %184 = sbr.rel (%p182) target = $region20
        $region19: #{tpu_custom_call.1} parent=11 // pred_region
          _
        $region20: #{tpu_custom_call.1} parent=11 // pred_fallthru
          _
        // Predicated region
        $region21: #{tpu_custom_call.1} parent=11 // pred_check
          %p185 = pneg %p107
        $region22: #{tpu_custom_call.1} parent=11 // pred_check_branch
          %187 = sbr.rel (%p185) target = $region24
        $region23: #{tpu_custom_call.1} parent=11 // pred_region
          %s189 = ssub.s32 2048, 2048
          %190 = vsyncadd [#allocation6], %s189
          %s191 = sshll.u32 [#allocation7], 4
          %s192 = int_to_ptr.vmem [resolvable:$true] %s191
          %197 = dma.hbm_to_vmem [thread:$0]  %s3, 2048, %s192, [#allocation6], 128, 128, 8
        $region24: #{tpu_custom_call.1} parent=11 // pred_fallthru
          _
        // Predicated region
        $region25: #{tpu_custom_call.1} parent=11 // pred_check
          %p198 = pneg %p128
        $region26: #{tpu_custom_call.1} parent=11 // pred_check_branch
          %200 = sbr.rel (%p198) target = $region28
        $region27: #{tpu_custom_call.1} parent=11 // pred_region
          _
        $region28: #{tpu_custom_call.1} parent=11 // pred_fallthru
          _
      $region12: #{tpu_custom_call.1} parent=5 // pred_fallthru
        _
      %p201 = scmp.lt.s32.totalorder %s18, 2
      // Predicated region
      $region29: #{tpu_custom_call.1} parent=5 // pred_check
        %p202 = pneg %p201
      $region30: #{tpu_custom_call.1} parent=5 // pred_check_branch
        %204 = sbr.rel (%p202) target = $region32
      $region31: #{tpu_custom_call.1} parent=5 // pred_region
        // Predicated region
        $region33: #{tpu_custom_call.1} parent=31 // pred_check
          %p205 = pneg %p38
        $region34: #{tpu_custom_call.1} parent=31 // pred_check_branch
          %207 = sbr.rel (%p205) target = $region36
        $region35: #{tpu_custom_call.1} parent=31 // pred_region
          %s208 = sand.u32 %s28, 1
          %s209 = scalar_lea.sflag [#allocation3], %s208
          %s210 = sand.u32 %s28, 1
          %s211 = smul.addr %s210, 32
          %s212 = scalar_lea.vmem [#allocation2], %s211
          %s213 = smul.u32 4, %s18
          %s214 = ssub.s32 6, %s213
          %p215 = scmp.lt.s32.totalorder %s214, 4
          %s216 = scalar_select %p215, %s214, 4
          %s217 = smul.u32 128, %s216
          %s219 = ssub.s32 512, %s217
          %220 = vsyncadd %s209, %s219
          %p221 = scmp.ne.s32.totalorder 0, %s217
          %s222 = smul.addr %s213, 128
          %s223 = scalar_lea.hbm %s0, %s222
          %s224 = smul.u32 8, %s216
          %s225 = sshll.u32 %s212, 4
          %s226 = int_to_ptr.vmem [resolvable:$true] %s225
          %s227 = sshll.u32 %s224, 4
          %231 = dma.hbm_to_vmem [thread:$0]  (%p221), %s223, %s227, %s226, %s209, 128, 128, 8
        $region36: #{tpu_custom_call.1} parent=31 // pred_fallthru
          _
      $region32: #{tpu_custom_call.1} parent=5 // pred_fallthru
        _
      %p232 = scmp.le.s32.totalorder 1, %s18
      %p233 = scmp.lt.s32.totalorder %s18, 3
      %p234 = pnand %p232, %p233
      %p235 = pneg %p234
      // Predicated region
      $region37: #{tpu_custom_call.1} parent=5 // pred_check
        _
      $region38: #{tpu_custom_call.1} parent=5 // pred_check_branch
        %237 = sbr.rel (%p234) target = $region40
      $region39: #{tpu_custom_call.1} parent=5 // pred_region
        %s238 = ssub.s32 %s18, 1
        %s239 = sand.u32 %s31, 1
        %s240 = scalar_lea.sflag [#allocation3], %s239
        %s241 = sand.u32 %s31, 1
        %s242 = smul.addr %s241, 32
        %s243 = scalar_lea.vmem [#allocation2], %s242
        // Predicated region
        $region41: #{tpu_custom_call.1} parent=39 // pred_check
          %p244 = pneg %p44
        $region42: #{tpu_custom_call.1} parent=39 // pred_check_branch
          %246 = sbr.rel (%p244) target = $region44
        $region43: #{tpu_custom_call.1} parent=39 // pred_region
          %247 = dma.done %s240, 512
        $region44: #{tpu_custom_call.1} parent=39 // pred_fallthru
          _
        // Predicated region
        $region45: #{tpu_custom_call.1} parent=39 // pred_check
          %p248 = pneg %p65
        $region46: #{tpu_custom_call.1} parent=39 // pred_check_branch
          %250 = sbr.rel (%p248) target = $region48
        $region47: #{tpu_custom_call.1} parent=39 // pred_region
          %251 = dma.done [#allocation6], 2048
        $region48: #{tpu_custom_call.1} parent=39 // pred_fallthru
          _
        // Predicated region
        $region49: #{tpu_custom_call.1} parent=39 // pred_check
          %p252 = pneg %p107
        $region50: #{tpu_custom_call.1} parent=39 // pred_check_branch
          %254 = sbr.rel (%p252) target = $region52
        $region51: #{tpu_custom_call.1} parent=39 // pred_region
          %255 = dma.done [#allocation6], 2048
        $region52: #{tpu_custom_call.1} parent=39 // pred_fallthru
          _
        %s256 = sand.u32 %s31, 1
        %s257 = scalar_lea.sflag [#allocation3], %s256
        %s258 = sand.u32 %s31, 1
        %s259 = smul.addr %s258, 32
        %s260 = scalar_lea.vmem [#allocation2], %s259
        %p261 = pneg %p44
        %p262 = pneg %p41
        %p263 = pneg %p65
        %p264 = pneg %p62
        %p265 = pneg %p86
        %p266 = pneg %p83
        %p267 = pneg %p107
        %p268 = pneg %p104
        %p269 = pneg %p128
        %p270 = pneg %p125
        %p271 = pneg %p154
        %p272 = pneg %p151
        %s273 = sand.u32 %s141, 1
        %s274 = scalar_lea.sflag [#allocation4], %s273
        %s275 = sand.u32 %s141, 1
        %s276 = smul.addr %s275, 32
        %s277 = scalar_lea.vmem [#allocation8], %s276
        %s278 = smul.u32 4, %s23
        %s279 = ssub.s32 6, %s278
        %p280 = scmp.lt.s32.totalorder %s279, 4
        %s281 = scalar_select %p280, %s279, 4
        %s282 = smul.u32 128, %s281
        %s283 = smul.u32 4, %s23
        %s284 = ssub.s32 6, %s283
        %p285 = scmp.lt.s32.totalorder %s284, 4
        %s286 = scalar_select %p285, %s284, 4
        %s287 = smul.u32 128, %s286
        %v288 = vld [vmem:[%s243] sm:$0xff]
        %v289 = vld [vmem:[%s243 + $0x8] sm:$0xff]
        %v290 = vld [vmem:[%s243 + $0x10] sm:$0xff]
        %v291 = vld [vmem:[%s243 + $0x18] sm:$0xff]
        %v292 = vld [vmem:[#allocation5] sm:$0xff]
        %v293 = vld [vmem:[#allocation5 + $0x8] sm:$0xff]
        %v294 = vld [vmem:[#allocation5 + $0x10] sm:$0xff]
        %v295 = vld [vmem:[#allocation5 + $0x18] sm:$0xff]
        %v296 = vld [vmem:[#allocation5 + $0x20] sm:$0xff]
        %v297 = vld [vmem:[#allocation5 + $0x28] sm:$0xff]
        %v298 = vld [vmem:[#allocation5 + $0x30] sm:$0xff]
        %v299 = vld [vmem:[#allocation5 + $0x38] sm:$0xff]
        %v300 = vld [vmem:[#allocation5 + $0x40] sm:$0xff]
        %v301 = vld [vmem:[#allocation5 + $0x48] sm:$0xff]
        %v302 = vld [vmem:[#allocation5 + $0x50] sm:$0xff]
        %v303 = vld [vmem:[#allocation5 + $0x58] sm:$0xff]
        %v304 = vld [vmem:[#allocation5 + $0x60] sm:$0xff]
        %v305 = vld [vmem:[#allocation5 + $0x68] sm:$0xff]
        %v306 = vld [vmem:[#allocation5 + $0x70] sm:$0xff]
        %v307 = vld [vmem:[#allocation5 + $0x78] sm:$0xff]
        %v308 = vld [vmem:[%s2] sm:$0x1]
        %v310 = vlaneseq
        %v311 = vshrl.u32 %v310, 7
        %v312 = vsub.s32 0, %v311
        %v313 = vrot.slane %v308, %v312
        %315 = vmatprep.subr.mxu0 0.0
        %316 = vmatpush1.msra.mxu0 %v292
        %317 = vmatprep.subr.mxu0 0.0
        %318 = vmatpush1.msra.mxu0 %v293
        %319 = vmatprep.subr.mxu0 0.0
        %320 = vmatpush1.msra.mxu0 %v294
        %321 = vmatprep.subr.mxu0 0.0
        %322 = vmatpush1.msra.mxu0 %v295
        %323 = vmatprep.subr.mxu0 0.0
        %324 = vmatpush1.msra.mxu0 %v296
        %325 = vmatprep.subr.mxu0 0.0
        %326 = vmatpush1.msra.mxu0 %v297
        %327 = vmatprep.subr.mxu0 0.0
        %328 = vmatpush1.msra.mxu0 %v298
        %329 = vmatprep.subr.mxu0 0.0
        %330 = vmatpush1.msra.mxu0 %v299
        %331 = vmatprep.subr.mxu0 0.0
        %332 = vmatpush1.msra.mxu0 %v300
        %333 = vmatprep.subr.mxu0 0.0
        %334 = vmatpush1.msra.mxu0 %v301
        %335 = vmatprep.subr.mxu0 0.0
        %336 = vmatpush1.msra.mxu0 %v302
        %337 = vmatprep.subr.mxu0 0.0
        %338 = vmatpush1.msra.mxu0 %v303
        %339 = vmatprep.subr.mxu0 0.0
        %340 = vmatpush1.msra.mxu0 %v304
        %341 = vmatprep.subr.mxu0 0.0
        %342 = vmatpush1.msra.mxu0 %v305
        %343 = vmatprep.subr.mxu0 0.0
        %344 = vmatpush1.msra.mxu0 %v306
        %345 = vmatprep.subr.mxu0 0.0
        %346 = vmatpush1.msra.mxu0 %v307
        %347 = vmatprep.subr.mxu0 0.0
        %348 = vmatpush1.msra.mxu0 0.0
        %349 = vmatprep.subr.mxu0 0.0
        %350 = vmatpush1.msra.mxu0 0.0
        %351 = vmatprep.subr.mxu0 0.0
        %352 = vmatpush1.msra.mxu0 0.0
        %353 = vmatprep.subr.mxu0 0.0
        %354 = vmatpush1.msra.mxu0 0.0
        %355 = vmatprep.subr.mxu0 0.0
        %356 = vmatpush1.msra.mxu0 0.0
        %357 = vmatprep.subr.mxu0 0.0
        %358 = vmatpush1.msra.mxu0 0.0
        %359 = vmatprep.subr.mxu0 0.0
        %360 = vmatpush1.msra.mxu0 0.0
        %361 = vmatprep.subr.mxu0 0.0
        %362 = vmatpush1.msra.mxu0 0.0
        %363 = vmatprep.subr.mxu0 0.0
        %364 = vmatpush1.msra.mxu0 0.0
        %365 = vmatprep.subr.mxu0 0.0
        %366 = vmatpush1.msra.mxu0 0.0
        %367 = vmatprep.subr.mxu0 0.0
        %368 = vmatpush1.msra.mxu0 0.0
        %369 = vmatprep.subr.mxu0 0.0
        %370 = vmatpush1.msra.mxu0 0.0
        %371 = vmatprep.subr.mxu0 0.0
        %372 = vmatpush1.msra.mxu0 0.0
        %373 = vmatprep.subr.mxu0 0.0
        %374 = vmatpush1.msra.mxu0 0.0
        %375 = vmatprep.subr.mxu0 0.0
        %376 = vmatpush1.msra.mxu0 0.0
        %377 = vmatprep.subr.mxu0 0.0
        %378 = vmatpush1.msra.mxu0 0.0
        %379 = vmatprep.mubr.f32.mxu0 0.0
        %380 = vmatmul.mubr.f32.gmra.mrb[0].mxu0 %v288
        %v381 = vpop.f32.mrb[0].mxu0
        %v382 = vadd.f32 %v313, %v381
        %v383 = vpop.f32.mrb[0].mxu0
        %384 = vmatprep.mubr.f32.mxu0 0.0
        %385 = vmatmul.mubr.f32.gmra.mrb[0].mxu0 %v289
        %v386 = vpop.f32.mrb[0].mxu0
        %v387 = vadd.f32 %v313, %v386
        %v388 = vpop.f32.mrb[0].mxu0
        %389 = vmatprep.mubr.f32.mxu0 0.0
        %390 = vmatmul.mubr.f32.gmra.mrb[0].mxu0 %v290
        %v391 = vpop.f32.mrb[0].mxu0
        %v392 = vadd.f32 %v313, %v391
        %v393 = vpop.f32.mrb[0].mxu0
        %394 = vmatprep.mubr.f32.mxu0 0.0
        %395 = vmatmul.mubr.f32.gmra.mrb[0].mxu0 %v291
        %v396 = vpop.f32.mrb[0].mxu0
        %v397 = vadd.f32 %v313, %v396
        %v398 = vpop.f32.mrb[0].mxu0
        %399 = vdwg.mxu0
        %v400 = vmax.f32 %v382, 0.0
        %v401 = vmax.f32 %v387, 0.0
        %v402 = vmax.f32 %v392, 0.0
        %v403 = vmax.f32 %v397, 0.0
        %v404 = vld [vmem:[#allocation7] sm:$0xff]
        %v405 = vld [vmem:[#allocation7 + $0x8] sm:$0xff]
        %v406 = vld [vmem:[#allocation7 + $0x10] sm:$0xff]
        %v407 = vld [vmem:[#allocation7 + $0x18] sm:$0xff]
        %v408 = vld [vmem:[#allocation7 + $0x20] sm:$0xff]
        %v409 = vld [vmem:[#allocation7 + $0x28] sm:$0xff]
        %v410 = vld [vmem:[#allocation7 + $0x30] sm:$0xff]
        %v411 = vld [vmem:[#allocation7 + $0x38] sm:$0xff]
        %v412 = vld [vmem:[#allocation7 + $0x40] sm:$0xff]
        %v413 = vld [vmem:[#allocation7 + $0x48] sm:$0xff]
        %v414 = vld [vmem:[#allocation7 + $0x50] sm:$0xff]
        %v415 = vld [vmem:[#allocation7 + $0x58] sm:$0xff]
        %v416 = vld [vmem:[#allocation7 + $0x60] sm:$0xff]
        %v417 = vld [vmem:[#allocation7 + $0x68] sm:$0xff]
        %v418 = vld [vmem:[#allocation7 + $0x70] sm:$0xff]
        %v419 = vld [vmem:[#allocation7 + $0x78] sm:$0xff]
        %v420 = vld [vmem:[%s4] sm:$0x1]
        %v422 = vlaneseq
        %v423 = vshrl.u32 %v422, 7
        %v424 = vsub.s32 0, %v423
        %v425 = vrot.slane %v420, %v424
        %427 = vmatprep.subr.mxu0 0.0
        %428 = vmatpush1.msra.mxu0 %v404
        %429 = vmatprep.subr.mxu0 0.0
        %430 = vmatpush1.msra.mxu0 %v405
        %431 = vmatprep.subr.mxu0 0.0
        %432 = vmatpush1.msra.mxu0 %v406
        %433 = vmatprep.subr.mxu0 0.0
        %434 = vmatpush1.msra.mxu0 %v407
        %435 = vmatprep.subr.mxu0 0.0
        %436 = vmatpush1.msra.mxu0 %v408
        %437 = vmatprep.subr.mxu0 0.0
        %438 = vmatpush1.msra.mxu0 %v409
        %439 = vmatprep.subr.mxu0 0.0
        %440 = vmatpush1.msra.mxu0 %v410
        %441 = vmatprep.subr.mxu0 0.0
        %442 = vmatpush1.msra.mxu0 %v411
        %443 = vmatprep.subr.mxu0 0.0
        %444 = vmatpush1.msra.mxu0 %v412
        %445 = vmatprep.subr.mxu0 0.0
        %446 = vmatpush1.msra.mxu0 %v413
        %447 = vmatprep.subr.mxu0 0.0
        %448 = vmatpush1.msra.mxu0 %v414
        %449 = vmatprep.subr.mxu0 0.0
        %450 = vmatpush1.msra.mxu0 %v415
        %451 = vmatprep.subr.mxu0 0.0
        %452 = vmatpush1.msra.mxu0 %v416
        %453 = vmatprep.subr.mxu0 0.0
        %454 = vmatpush1.msra.mxu0 %v417
        %455 = vmatprep.subr.mxu0 0.0
        %456 = vmatpush1.msra.mxu0 %v418
        %457 = vmatprep.subr.mxu0 0.0
        %458 = vmatpush1.msra.mxu0 %v419
        %459 = vmatprep.subr.mxu0 0.0
        %460 = vmatpush1.msra.mxu0 0.0
        %461 = vmatprep.subr.mxu0 0.0
        %462 = vmatpush1.msra.mxu0 0.0
        %463 = vmatprep.subr.mxu0 0.0
        %464 = vmatpush1.msra.mxu0 0.0
        %465 = vmatprep.subr.mxu0 0.0
        %466 = vmatpush1.msra.mxu0 0.0
        %467 = vmatprep.subr.mxu0 0.0
        %468 = vmatpush1.msra.mxu0 0.0
        %469 = vmatprep.subr.mxu0 0.0
        %470 = vmatpush1.msra.mxu0 0.0
        %471 = vmatprep.subr.mxu0 0.0
        %472 = vmatpush1.msra.mxu0 0.0
        %473 = vmatprep.subr.mxu0 0.0
        %474 = vmatpush1.msra.mxu0 0.0
        %475 = vmatprep.subr.mxu0 0.0
        %476 = vmatpush1.msra.mxu0 0.0
        %477 = vmatprep.subr.mxu0 0.0
        %478 = vmatpush1.msra.mxu0 0.0
        %479 = vmatprep.subr.mxu0 0.0
        %480 = vmatpush1.msra.mxu0 0.0
        %481 = vmatprep.subr.mxu0 0.0
        %482 = vmatpush1.msra.mxu0 0.0
        %483 = vmatprep.subr.mxu0 0.0
        %484 = vmatpush1.msra.mxu0 0.0
        %485 = vmatprep.subr.mxu0 0.0
        %486 = vmatpush1.msra.mxu0 0.0
        %487 = vmatprep.subr.mxu0 0.0
        %488 = vmatpush1.msra.mxu0 0.0
        %489 = vmatprep.subr.mxu0 0.0
        %490 = vmatpush1.msra.mxu0 0.0
        %491 = vmatprep.mubr.f32.mxu0 0.0
        %492 = vmatmul.mubr.f32.gmra.mrb[0].mxu0 %v400
        %v493 = vpop.f32.mrb[0].mxu0
        %v494 = vadd.f32 %v425, %v493
        %v495 = vpop.f32.mrb[0].mxu0
        %496 = vmatprep.mubr.f32.mxu0 0.0
        %497 = vmatmul.mubr.f32.gmra.mrb[0].mxu0 %v401
        %v498 = vpop.f32.mrb[0].mxu0
        %v499 = vadd.f32 %v425, %v498
        %v500 = vpop.f32.mrb[0].mxu0
        %501 = vmatprep.mubr.f32.mxu0 0.0
        %502 = vmatmul.mubr.f32.gmra.mrb[0].mxu0 %v402
        %v503 = vpop.f32.mrb[0].mxu0
        %v504 = vadd.f32 %v425, %v503
        %v505 = vpop.f32.mrb[0].mxu0
        %506 = vmatprep.mubr.f32.mxu0 0.0
        %507 = vmatmul.mubr.f32.gmra.mrb[0].mxu0 %v403
        %v508 = vpop.f32.mrb[0].mxu0
        %v509 = vadd.f32 %v425, %v508
        %v510 = vpop.f32.mrb[0].mxu0
        %511 = vdwg.mxu0
        %v512 = vmax.f32 %v494, 0.0
        %v513 = vmax.f32 %v499, 0.0
        %v514 = vmax.f32 %v504, 0.0
        %v515 = vmax.f32 %v509, 0.0
        %v516 = vadd.f32 %v288, %v512
        %v517 = vadd.f32 %v289, %v513
        %v518 = vadd.f32 %v290, %v514
        %v519 = vadd.f32 %v291, %v515
        %520 = vst [vmem:[%s277] sm:$0xff] %v516
        %521 = vst [vmem:[%s277 + $0x8] sm:$0xff] %v517
        %522 = vst [vmem:[%s277 + $0x10] sm:$0xff] %v518
        %523 = vst [vmem:[%s277 + $0x18] sm:$0xff] %v519
        %s524 = sand.u32 %s141, 1
        %s525 = scalar_lea.sflag [#allocation4], %s524
        %s526 = sand.u32 %s141, 1
        %s527 = smul.addr %s526, 32
        %s528 = scalar_lea.vmem [#allocation8], %s527
        // Predicated region
        $region53: #{tpu_custom_call.1} parent=39 // pred_check
          %p529 = pneg %p151
        $region54: #{tpu_custom_call.1} parent=39 // pred_check_branch
          %531 = sbr.rel (%p529) target = $region56
        $region55: #{tpu_custom_call.1} parent=39 // pred_region
          %s532 = smul.u32 4, %s23
          %s533 = ssub.s32 6, %s532
          %p534 = scmp.lt.s32.totalorder %s533, 4
          %s535 = scalar_select %p534, %s533, 4
          %s536 = smul.u32 128, %s535
          %s538 = ssub.s32 512, %s536
          %539 = vsyncadd %s525, %s538
          %p540 = scmp.ne.s32.totalorder 0, %s536
          %s541 = smul.addr %s532, 128
          %s542 = scalar_lea.hbm %s5, %s541
          %s543 = smul.u32 8, %s535
          %s544 = sshll.u32 %s528, 4
          %s545 = int_to_ptr.vmem [resolvable:$true] %s544
          %s546 = sshll.u32 %s543, 4
          %550 = dma.vmem_to_hbm [thread:$0]  (%p540), %s545, %s546, %s542, %s525, 128, 128, 8
        $region56: #{tpu_custom_call.1} parent=39 // pred_fallthru
          _
      $region40: #{tpu_custom_call.1} parent=5 // pred_fallthru
        _
      %p551 = scmp.le.s32.totalorder 2, %s18
      // Predicated region
      $region57: #{tpu_custom_call.1} parent=5 // pred_check
        %p552 = pneg %p551
      $region58: #{tpu_custom_call.1} parent=5 // pred_check_branch
        %554 = sbr.rel (%p552) target = $region60
      $region59: #{tpu_custom_call.1} parent=5 // pred_region
        %s555 = ssub.s32 %s18, 2
        // Predicated region
        $region61: #{tpu_custom_call.1} parent=59 // pred_check
          %p556 = pneg %p157
        $region62: #{tpu_custom_call.1} parent=59 // pred_check_branch
          %558 = sbr.rel (%p556) target = $region64
        $region63: #{tpu_custom_call.1} parent=59 // pred_region
          %s559 = sand.u32 %s142, 1
          %s560 = scalar_lea.sflag [#allocation4], %s559
          %s561 = sand.u32 %s142, 1
          %s562 = smul.addr %s561, 32
          %s563 = scalar_lea.vmem [#allocation8], %s562
          %564 = dma.done %s560, 512
        $region64: #{tpu_custom_call.1} parent=59 // pred_fallthru
          _
      $region60: #{tpu_custom_call.1} parent=5 // pred_fallthru
        _
    $region6: #{tpu_custom_call.1} parent=1 // loop_footer
      %s22 = sadd.s32 1, %s18
    $region7: #{tpu_custom_call.1} parent=1 // loop_footer_branch
      %17 = sbr.rel target = $region3
    $region8: #{tpu_custom_call.1} parent=1 // loop_exit
      _
    %565 = vsyncpa [#allocation3], 1
    %s566 = scalar_lea.sflag [#allocation3], 1
    %567 = vsyncpa %s566, 1
    %568 = vsyncpa [#allocation6], 1
    %569 = vsyncpa [#allocation4], 1
    %s570 = scalar_lea.sflag [#allocation4], 1
    %571 = vsyncpa %s570, 1

</llo_original>
